<compile_context>
chip_gen: v7x
topology: tpu7x:2x2x1
jax: 0.10.0
libtpu: 0.0.40
codegen_flags: <defaults>
</compile_context>

<pallas_src>
import math
import functools

import jax
import jax.numpy as jnp
from jax import lax
from jax.experimental import pallas as pl
from jax.experimental.pallas import tpu as pltpu


def _round_up(x, m):
    return (x + m - 1) // m * m


def _num_tensorcores():
    """TensorCores per chip: 2 on v7x, 1 on v5e/v6e (best-effort detection)."""
    try:
        kind = jax.devices()[0].device_kind.lower()
    except Exception:
        return 1
    return 2 if "v7" in kind else 1


def _mlp_kernel(x_ref, w1t_ref, b1_ref, w2t_ref, b2_ref, o_ref, *, eps):
    # x_ref:   (tn, in_f)    native-layout tile of the input rows (f32)
    # w1t_ref: (out_f, in_f) bf16 == W1^T
    # b1_ref:  (out_f, 1)    f32 column bias
    # w2t_ref: (out_f, out_f) bf16 == (gamma * W2)^T   (LN affine folded in)
    # b2_ref:  (out_f, 1)    f32 column bias (beta folded in)
    # o_ref:   (tn, out_f)   output tile in the module's native layout

    # On-chip rows->lanes layout change (f32 XLU transpose), then bf16 cast on
    # the lane-dense view.  All elementwise work below runs with rows on the
    # 128-wide lane axis, using every lane of every vreg.
    xt = jnp.transpose(x_ref[...]).astype(w1t_ref.dtype)       # (in_f, tn)

    # fc1 (transposed): (out_f, in_f) @ (in_f, tn) -> (out_f, tn), f32 acc.
    h = jnp.dot(w1t_ref[...], xt, preferred_element_type=jnp.float32)
    h = h + b1_ref[...]

    # Exact (erf-based) GELU -- matches torch.nn.GELU default.
    h = 0.5 * h * (1.0 + lax.erf(h * (1.0 / math.sqrt(2.0))))

    # LayerNorm over the feature axis (axis 0 here), one-pass variance.
    inv_f = 1.0 / h.shape[0]
    mu = jnp.sum(h, axis=0, keepdims=True) * inv_f             # (1, tn)
    msq = jnp.sum(h * h, axis=0, keepdims=True) * inv_f        # (1, tn)
    var = jnp.maximum(msq - mu * mu, 0.0)
    hn = (h - mu) * lax.rsqrt(var + eps)

    # dropout: identity (inference).

    # fc2 (transposed, gamma/beta folded): (out_f, out_f) @ (out_f, tn).
    out_t = jnp.dot(w2t_ref[...], hn.astype(w2t_ref.dtype),
                    preferred_element_type=jnp.float32)
    out_t = out_t + b2_ref[...]

    # Back to the module's (rows, features) layout on-chip.  The 32-wide
    # masked store is cheaper than an extra XLA transpose pass over HBM.
    o_ref[...] = jnp.transpose(out_t).astype(o_ref.dtype)


def mlp_forward(x, w1, b1, w2, b2, gamma, beta, *, eps=1e-6, tn_max=8192):
    """x: (N, in_f); w1: (in_f, out_f); w2: (out_f, out_f); b/gamma/beta: (out_f,).

    Note: the module sets LayerNorm eps=1e-06 explicitly, so the default here
    matches the spec (torch's own default would be 1e-5).
    """
    N, in_f = x.shape
    out_f = w1.shape[1]

    gamma = jnp.asarray(gamma, jnp.float32).reshape(-1)
    beta = jnp.asarray(beta, jnp.float32).reshape(-1)
    b1 = jnp.asarray(b1, jnp.float32).reshape(-1)
    b2 = jnp.asarray(b2, jnp.float32).reshape(-1)

    # Fold the LayerNorm affine into fc2 (host side, tiny, numerically equal):
    #   (hn*gamma + beta) @ W2 + b2 == hn @ (gamma[:,None]*W2) + (beta @ W2 + b2)
    w2f = gamma[:, None] * jnp.asarray(w2, jnp.float32)
    b2f = beta @ jnp.asarray(w2, jnp.float32) + b2

    mm_dtype = jnp.bfloat16                                  # MXU fast path
    w1t = jnp.asarray(w1).T.astype(mm_dtype)                 # (out_f, in_f)
    w2t = w2f.T.astype(mm_dtype)                             # (out_f, out_f)
    b1c = b1.reshape(out_f, 1)                               # (out_f, 1) f32
    b2c = b2f.reshape(out_f, 1)                              # (out_f, 1) f32

    # Lane-tile selection, gated on TensorCore count:
    #  * 1 TC (v5e/v6e): one big tile (up to tn_max) -> minimal grid overhead.
    #  * 2 TC (v7x):     an even number of grid steps -> both cores stay busy.
    num_tc = _num_tensorcores()
    tn_max = max(128, _round_up(tn_max, 128))
    n128 = _round_up(max(N, 1), 128)
    if num_tc >= 2 and n128 >= num_tc * 128:
        steps = num_tc * pl.cdiv(n128, num_tc * tn_max)      # multiple of num_tc
        tn = min(tn_max, _round_up(pl.cdiv(n128, steps), 128))
    else:
        tn = min(tn_max, n128)
    grid = (pl.cdiv(N, tn),)                                 # no host-side pad

    out_dtype = x.dtype
    block_bytes = (tn * in_f * x.dtype.itemsize
                   + tn * out_f * jnp.dtype(out_dtype).itemsize)
    # Double-buffered in/out blocks + intermediates + headroom; explicit so
    # large tiles also fit under v5e's 16 MiB scoped default.
    vmem_limit = int(min(48 * 1024 * 1024, 4 * block_bytes + (8 << 20)))

    kernel = functools.partial(_mlp_kernel, eps=eps)
    out = pl.pallas_call(
        kernel,
        out_shape=jax.ShapeDtypeStruct((N, out_f), out_dtype),
        grid_spec=pltpu.PrefetchScalarGridSpec(
            num_scalar_prefetch=0,
            grid=grid,
            in_specs=[
                pl.BlockSpec((tn, in_f), lambda i: (i, 0)),      # x tile (native)
                pl.BlockSpec((out_f, in_f), lambda i: (0, 0)),   # W1^T (resident)
                pl.BlockSpec((out_f, 1), lambda i: (0, 0)),      # b1 column
                pl.BlockSpec((out_f, out_f), lambda i: (0, 0)),  # (gamma*W2)^T
                pl.BlockSpec((out_f, 1), lambda i: (0, 0)),      # b2' column
            ],
            out_specs=pl.BlockSpec((tn, out_f), lambda i: (i, 0)),
        ),
        compiler_params=pltpu.CompilerParams(
            dimension_semantics=("parallel",),
            vmem_limit_bytes=vmem_limit),
    )(x, w1t, b1c, w2t, b2c)
    return out


def xavier_uniform(key, fan_in, fan_out, dtype=jnp.float32):
    # matches torch.nn.init.xavier_uniform_ (gain=1)
    limit = math.sqrt(6.0 / (fan_in + fan_out))
    return jax.random.uniform(key, (fan_in, fan_out), dtype=dtype,
                              minval=-limit, maxval=limit)


if __name__ == "__main__":
    in_features = 32
    out_features = 32
    N = 512   # node count (small demo)

    key = jax.random.PRNGKey(0)
    k_x, k_w1, k_b1, k_w2, k_b2, k_g, k_be = jax.random.split(key, 7)

    x = jax.random.normal(k_x, (N, in_features), dtype=jnp.float32)

    # Parameters (matching reset_parameters semantics).  Linear weights are
    # stored as (in, out) == transpose of the PyTorch (out, in) weight.
    w1 = xavier_uniform(k_w1, in_features, out_features)
    b1 = (1e-6 * jax.random.normal(k_b1, (out_features,))).astype(jnp.float32)
    w2 = xavier_uniform(k_w2, out_features, out_features)
    b2 = (1e-6 * jax.random.normal(k_b2, (out_features,))).astype(jnp.float32)
    # LayerNorm affine (default init is ones/zeros; perturbed to exercise the
    # gamma/beta folding path).
    gamma = (1.0 + 0.1 * jax.random.normal(k_g, (out_features,))).astype(jnp.float32)
    beta = (0.1 * jax.random.normal(k_be, (out_features,))).astype(jnp.float32)

    out = mlp_forward(x, w1, b1, w2, b2, gamma, beta)
    jax.block_until_ready(out)
    assert out.shape == (N, out_features)
    assert out.dtype == x.dtype

    # Reference 1: exact f32 module semantics (fc1 -> erf GELU -> LN -> fc2).
    # Loose tolerance covers the kernel's bf16 MXU inputs.
    h = x @ w1 + b1
    h = 0.5 * h * (1.0 + lax.erf(h / math.sqrt(2.0)))
    mu = jnp.mean(h, axis=-1, keepdims=True)
    var = jnp.mean((h - mu) ** 2, axis=-1, keepdims=True)
    hn = (h - mu) / jnp.sqrt(var + 1e-6) * gamma + beta
    ref_f32 = hn @ w2 + b2
    assert jnp.allclose(out, ref_f32, atol=5e-2, rtol=5e-2), \
        float(jnp.max(jnp.abs(out - ref_f32)))

    # Reference 2: same algorithm (bf16 matmul inputs, one-pass variance,
    # folded affine) in plain JAX -- tighter check of the Pallas plumbing
    # (tiling, ragged blocks, in-kernel layout changes).
    bf = jnp.bfloat16
    w2f = gamma[:, None] * w2
    b2f = beta @ w2 + b2
    h = jnp.dot(x.astype(bf), w1.astype(bf),
                preferred_element_type=jnp.float32) + b1
    h = 0.5 * h * (1.0 + lax.erf(h / math.sqrt(2.0)))
    mu = jnp.mean(h, axis=-1, keepdims=True)
    msq = jnp.mean(h * h, axis=-1, keepdims=True)
    var = jnp.maximum(msq - mu * mu, 0.0)
    hn = (h - mu) * lax.rsqrt(var + 1e-6)
    ref_bf = jnp.dot(hn.astype(bf), w2f.astype(bf),
                     preferred_element_type=jnp.float32) + b2f
    assert jnp.allclose(out, ref_bf, atol=1e-2, rtol=1e-2), \
        float(jnp.max(jnp.abs(out - ref_bf)))

    print("KERNEL_OK")
</pallas_src>

<mosaic_0001>
module attributes {stable_mosaic.version = 11 : i64} {
  func.func @_mlp_kernel(%arg0: i32, %arg1: memref<512x32xf32, #tpu.memory_space<vmem>>, %arg2: memref<32x32xbf16, #tpu.memory_space<vmem>>, %arg3: memref<32x1xf32, #tpu.memory_space<vmem>>, %arg4: memref<32x32xbf16, #tpu.memory_space<vmem>>, %arg5: memref<32x1xf32, #tpu.memory_space<vmem>>, %arg6: memref<512x32xf32, #tpu.memory_space<vmem>>) attributes {dimension_semantics = [#tpu.dimension_semantics<parallel>], iteration_bounds = array<i64: 1>, scalar_prefetch = 0 : i64, scratch_operands = 0 : i64, tpu.core_type = #tpu.core_type<tc>, window_params = [{transform_indices = @transform_0, window_bounds = array<i64: 512, 32>}, {pipeline_mode = #tpu.pipeline_mode<synchronous>, transform_indices = @transform_1, window_bounds = array<i64: 32, 32>}, {pipeline_mode = #tpu.pipeline_mode<synchronous>, transform_indices = @transform_2, window_bounds = array<i64: 32, 1>}, {pipeline_mode = #tpu.pipeline_mode<synchronous>, transform_indices = @transform_3, window_bounds = array<i64: 32, 32>}, {pipeline_mode = #tpu.pipeline_mode<synchronous>, transform_indices = @transform_4, window_bounds = array<i64: 32, 1>}, {transform_indices = @transform_5, window_bounds = array<i64: 512, 32>}]} {
    %c0 = arith.constant 0 : index
    %c0_0 = arith.constant 0 : index
    %0 = vector.load %arg1[%c0, %c0_0] : memref<512x32xf32, #tpu.memory_space<vmem>>, vector<512x32xf32>
    %1 = tpu.transpose %0, [1, 0] : vector<512x32xf32> -> vector<32x512xf32>
    %2 = arith.truncf %1 : vector<32x512xf32> to vector<32x512xbf16>
    %c0_1 = arith.constant 0 : index
    %c0_2 = arith.constant 0 : index
    %3 = vector.load %arg2[%c0_1, %c0_2] : memref<32x32xbf16, #tpu.memory_space<vmem>>, vector<32x32xbf16>
    %cst = arith.constant dense<0.000000e+00> : vector<32x512xf32>
    %4 = tpu.matmul %3, %2, %cst {dimension_numbers = #tpu.dot_dimension_numbers<[1], [0], [0], [1], [0, 0, 1, 1], [], []>} : vector<32x32xbf16>, vector<32x512xbf16>, vector<32x512xf32> -> vector<32x512xf32>
    %c0_3 = arith.constant 0 : index
    %c0_4 = arith.constant 0 : index
    %5 = vector.load %arg3[%c0_3, %c0_4] : memref<32x1xf32, #tpu.memory_space<vmem>>, vector<32x1xf32>
    %6 = vector.broadcast %5 : vector<32x1xf32> to vector<32x512xf32>
    %7 = arith.addf %4, %6 : vector<32x512xf32>
    %cst_5 = arith.constant 5.000000e-01 : f32
    %8 = vector.broadcast %cst_5 : f32 to vector<32x512xf32>
    %9 = arith.mulf %8, %7 : vector<32x512xf32>
    %cst_6 = arith.constant 0.707106769 : f32
    %10 = vector.broadcast %cst_6 : f32 to vector<32x512xf32>
    %11 = arith.mulf %7, %10 : vector<32x512xf32>
    %12 = math.erf %11 : vector<32x512xf32>
    %cst_7 = arith.constant 1.000000e+00 : f32
    %13 = vector.broadcast %cst_7 : f32 to vector<32x512xf32>
    %14 = arith.addf %13, %12 : vector<32x512xf32>
    %15 = arith.mulf %9, %14 : vector<32x512xf32>
    %cst_8 = arith.constant dense<0.000000e+00> : vector<512xf32>
    %16 = vector.multi_reduction <add>, %15, %cst_8 [0] : vector<32x512xf32> to vector<512xf32>
    %17 = vector.shape_cast %16 : vector<512xf32> to vector<1x512xf32>
    %cst_9 = arith.constant 3.125000e-02 : f32
    %18 = vector.broadcast %cst_9 : f32 to vector<1x512xf32>
    %19 = arith.mulf %17, %18 : vector<1x512xf32>
    %20 = arith.mulf %15, %15 : vector<32x512xf32>
    %cst_10 = arith.constant dense<0.000000e+00> : vector<512xf32>
    %21 = vector.multi_reduction <add>, %20, %cst_10 [0] : vector<32x512xf32> to vector<512xf32>
    %22 = vector.shape_cast %21 : vector<512xf32> to vector<1x512xf32>
    %cst_11 = arith.constant 3.125000e-02 : f32
    %23 = vector.broadcast %cst_11 : f32 to vector<1x512xf32>
    %24 = arith.mulf %22, %23 : vector<1x512xf32>
    %25 = arith.mulf %19, %19 : vector<1x512xf32>
    %26 = arith.subf %24, %25 : vector<1x512xf32>
    %cst_12 = arith.constant 0.000000e+00 : f32
    %27 = vector.broadcast %cst_12 : f32 to vector<1x512xf32>
    %28 = arith.maximumf %26, %27 : vector<1x512xf32>
    %29 = vector.broadcast %19 : vector<1x512xf32> to vector<32x512xf32>
    %30 = arith.subf %15, %29 : vector<32x512xf32>
    %cst_13 = arith.constant 9.99999997E-7 : f32
    %31 = vector.broadcast %cst_13 : f32 to vector<1x512xf32>
    %32 = arith.addf %28, %31 : vector<1x512xf32>
    %33 = math.rsqrt %32 : vector<1x512xf32>
    %34 = vector.broadcast %33 : vector<1x512xf32> to vector<32x512xf32>
    %35 = arith.mulf %30, %34 : vector<32x512xf32>
    %c0_14 = arith.constant 0 : index
    %c0_15 = arith.constant 0 : index
    %36 = vector.load %arg4[%c0_14, %c0_15] : memref<32x32xbf16, #tpu.memory_space<vmem>>, vector<32x32xbf16>
    %37 = arith.truncf %35 : vector<32x512xf32> to vector<32x512xbf16>
    %cst_16 = arith.constant dense<0.000000e+00> : vector<32x512xf32>
    %38 = tpu.matmul %36, %37, %cst_16 {dimension_numbers = #tpu.dot_dimension_numbers<[1], [0], [0], [1], [0, 0, 1, 1], [], []>} : vector<32x32xbf16>, vector<32x512xbf16>, vector<32x512xf32> -> vector<32x512xf32>
    %c0_17 = arith.constant 0 : index
    %c0_18 = arith.constant 0 : index
    %39 = vector.load %arg5[%c0_17, %c0_18] : memref<32x1xf32, #tpu.memory_space<vmem>>, vector<32x1xf32>
    %40 = vector.broadcast %39 : vector<32x1xf32> to vector<32x512xf32>
    %41 = arith.addf %38, %40 : vector<32x512xf32>
    %42 = tpu.transpose %41, [1, 0] : vector<32x512xf32> -> vector<512x32xf32>
    %c0_19 = arith.constant 0 : index
    %c0_20 = arith.constant 0 : index
    %43 = vector.load %arg6[%c0_19, %c0_20] : memref<512x32xf32, #tpu.memory_space<vmem>>, vector<512x32xf32>
    tpu.vector_store %arg6[%c0_19, %c0_20], %42 {strides = array<i32>} : memref<512x32xf32, #tpu.memory_space<vmem>>, vector<512x32xf32>,
    return
  }
  func.func @transform_0(%arg0: i32) -> (i32, i32) {
    %c0_i32 = arith.constant 0 : i32
    %c0_i32_0 = arith.constant 0 : i32
    return %arg0, %c0_i32 : i32, i32
  }
  func.func @transform_1(%arg0: i32) -> (i32, i32) {
    %c0_i32 = arith.constant 0 : i32
    %c0_i32_0 = arith.constant 0 : i32
    %c0_i32_1 = arith.constant 0 : i32
    return %c0_i32, %c0_i32_0 : i32, i32
  }
  func.func @transform_2(%arg0: i32) -> (i32, i32) {
    %c0_i32 = arith.constant 0 : i32
    %c0_i32_0 = arith.constant 0 : i32
    %c0_i32_1 = arith.constant 0 : i32
    return %c0_i32, %c0_i32_0 : i32, i32
  }
  func.func @transform_3(%arg0: i32) -> (i32, i32) {
    %c0_i32 = arith.constant 0 : i32
    %c0_i32_0 = arith.constant 0 : i32
    %c0_i32_1 = arith.constant 0 : i32
    return %c0_i32, %c0_i32_0 : i32, i32
  }
  func.func @transform_4(%arg0: i32) -> (i32, i32) {
    %c0_i32 = arith.constant 0 : i32
    %c0_i32_0 = arith.constant 0 : i32
    %c0_i32_1 = arith.constant 0 : i32
    return %c0_i32, %c0_i32_0 : i32, i32
  }
  func.func @transform_5(%arg0: i32) -> (i32, i32) {
    %c0_i32 = arith.constant 0 : i32
    %c0_i32_0 = arith.constant 0 : i32
    return %arg0, %c0_i32 : i32, i32
  }
}

</mosaic_0001>

<llo_original>
// kernel: tpu_custom_call.1
$region0: #{tpu_custom_call.1}
  #allocation0 [shape = 'u32[]', space=smem, size = 0x4, offset = 0x4, fixed_abs, tag = 'smem constant byte address 0x4 - core index']
  #allocation1 [shape = 'u32[144,128]{1,0:T(1,128)}', space=vmem, size = 0x12000, scoped, tag = 'internal scratch']
  %s0 = inlined_call_operand.vmem [shape: f32[512,32], index: 0, kind: input, shape index: {}]
  %s1 = inlined_call_operand.vmem [shape: bf16[32,32], index: 1, kind: input, shape index: {}]
  %s2 = inlined_call_operand.vmem [shape: f32[32,1], index: 2, kind: input, shape index: {}]
  %s3 = inlined_call_operand.vmem [shape: bf16[32,32], index: 3, kind: input, shape index: {}]
  %s4 = inlined_call_operand.vmem [shape: f32[32,1], index: 4, kind: input, shape index: {}]
  %s5 = inlined_call_operand.vmem [shape: f32[512,32], index: 5, kind: output, shape index: {}]
  %s6 = sld [smem:[#allocation0]]
  $region30: #{tpu_custom_call.1} parent=0
    _
  %s8 = ssub.s32 1, %s6
  %s9 = scalar_select 0, %s8, %s6
  // Predicated region
  $region2: #{tpu_custom_call.1} parent=0 // pred_check
    _
  $region3: #{tpu_custom_call.1} parent=0 // pred_check_branch
    %11 = sbr.rel (0) target = $region5
  $region4: #{tpu_custom_call.1} parent=0 // pred_region
    _
  $region5: #{tpu_custom_call.1} parent=0 // pred_fallthru
    _
  // Predicated region
  $region6: #{tpu_custom_call.1} parent=0 // pred_check
    _
  $region7: #{tpu_custom_call.1} parent=0 // pred_check_branch
    %13 = sbr.rel (0) target = $region9
  $region8: #{tpu_custom_call.1} parent=0 // pred_region
    _
  $region9: #{tpu_custom_call.1} parent=0 // pred_fallthru
    _
  // Predicated region
  $region10: #{tpu_custom_call.1} parent=0 // pred_check
    _
  $region11: #{tpu_custom_call.1} parent=0 // pred_check_branch
    %15 = sbr.rel (0) target = $region13
  $region12: #{tpu_custom_call.1} parent=0 // pred_region
    _
  $region13: #{tpu_custom_call.1} parent=0 // pred_fallthru
    _
  // Predicated region
  $region14: #{tpu_custom_call.1} parent=0 // pred_check
    _
  $region15: #{tpu_custom_call.1} parent=0 // pred_check_branch
    %17 = sbr.rel (0) target = $region17
  $region16: #{tpu_custom_call.1} parent=0 // pred_region
    _
  $region17: #{tpu_custom_call.1} parent=0 // pred_fallthru
    _
  // Predicated region
  $region18: #{tpu_custom_call.1} parent=0 // pred_check
    _
  $region19: #{tpu_custom_call.1} parent=0 // pred_check_branch
    %19 = sbr.rel (0) target = $region21
  $region20: #{tpu_custom_call.1} parent=0 // pred_region
    _
  $region21: #{tpu_custom_call.1} parent=0 // pred_fallthru
    _
  %v21 = vld [vmem:[%s0] sm:$0xff]
  %v22 = vld [vmem:[%s0 + $0x8] sm:$0xff]
  %v23 = vld [vmem:[%s0 + $0x10] sm:$0xff]
  %v24 = vld [vmem:[%s0 + $0x18] sm:$0xff]
  %v25 = vld [vmem:[%s0 + $0x20] sm:$0xff]
  %v26 = vld [vmem:[%s0 + $0x28] sm:$0xff]
  %v27 = vld [vmem:[%s0 + $0x30] sm:$0xff]
  %v28 = vld [vmem:[%s0 + $0x38] sm:$0xff]
  %v29 = vld [vmem:[%s0 + $0x40] sm:$0xff]
  %v30 = vld [vmem:[%s0 + $0x48] sm:$0xff]
  %v31 = vld [vmem:[%s0 + $0x50] sm:$0xff]
  %v32 = vld [vmem:[%s0 + $0x58] sm:$0xff]
  %v33 = vld [vmem:[%s0 + $0x60] sm:$0xff]
  %v34 = vld [vmem:[%s0 + $0x68] sm:$0xff]
  %v35 = vld [vmem:[%s0 + $0x70] sm:$0xff]
  %v36 = vld [vmem:[%s0 + $0x78] sm:$0xff]
  %v37 = vld [vmem:[%s0 + $0x80] sm:$0xff]
  %v38 = vld [vmem:[%s0 + $0x88] sm:$0xff]
  %v39 = vld [vmem:[%s0 + $0x90] sm:$0xff]
  %v40 = vld [vmem:[%s0 + $0x98] sm:$0xff]
  %v41 = vld [vmem:[%s0 + $0xa0] sm:$0xff]
  %v42 = vld [vmem:[%s0 + $0xa8] sm:$0xff]
  %v43 = vld [vmem:[%s0 + $0xb0] sm:$0xff]
  %v44 = vld [vmem:[%s0 + $0xb8] sm:$0xff]
  %v45 = vld [vmem:[%s0 + $0xc0] sm:$0xff]
  %v46 = vld [vmem:[%s0 + $0xc8] sm:$0xff]
  %v47 = vld [vmem:[%s0 + $0xd0] sm:$0xff]
  %v48 = vld [vmem:[%s0 + $0xd8] sm:$0xff]
  %v49 = vld [vmem:[%s0 + $0xe0] sm:$0xff]
  %v50 = vld [vmem:[%s0 + $0xe8] sm:$0xff]
  %v51 = vld [vmem:[%s0 + $0xf0] sm:$0xff]
  %v52 = vld [vmem:[%s0 + $0xf8] sm:$0xff]
  %v53 = vld [vmem:[%s0 + $0x100] sm:$0xff]
  %v54 = vld [vmem:[%s0 + $0x108] sm:$0xff]
  %v55 = vld [vmem:[%s0 + $0x110] sm:$0xff]
  %v56 = vld [vmem:[%s0 + $0x118] sm:$0xff]
  %v57 = vld [vmem:[%s0 + $0x120] sm:$0xff]
  %v58 = vld [vmem:[%s0 + $0x128] sm:$0xff]
  %v59 = vld [vmem:[%s0 + $0x130] sm:$0xff]
  %v60 = vld [vmem:[%s0 + $0x138] sm:$0xff]
  %v61 = vld [vmem:[%s0 + $0x140] sm:$0xff]
  %v62 = vld [vmem:[%s0 + $0x148] sm:$0xff]
  %v63 = vld [vmem:[%s0 + $0x150] sm:$0xff]
  %v64 = vld [vmem:[%s0 + $0x158] sm:$0xff]
  %v65 = vld [vmem:[%s0 + $0x160] sm:$0xff]
  %v66 = vld [vmem:[%s0 + $0x168] sm:$0xff]
  %v67 = vld [vmem:[%s0 + $0x170] sm:$0xff]
  %v68 = vld [vmem:[%s0 + $0x178] sm:$0xff]
  %v69 = vld [vmem:[%s0 + $0x180] sm:$0xff]
  %v70 = vld [vmem:[%s0 + $0x188] sm:$0xff]
  %v71 = vld [vmem:[%s0 + $0x190] sm:$0xff]
  %v72 = vld [vmem:[%s0 + $0x198] sm:$0xff]
  %v73 = vld [vmem:[%s0 + $0x1a0] sm:$0xff]
  %v74 = vld [vmem:[%s0 + $0x1a8] sm:$0xff]
  %v75 = vld [vmem:[%s0 + $0x1b0] sm:$0xff]
  %v76 = vld [vmem:[%s0 + $0x1b8] sm:$0xff]
  %v77 = vld [vmem:[%s0 + $0x1c0] sm:$0xff]
  %v78 = vld [vmem:[%s0 + $0x1c8] sm:$0xff]
  %v79 = vld [vmem:[%s0 + $0x1d0] sm:$0xff]
  %v80 = vld [vmem:[%s0 + $0x1d8] sm:$0xff]
  %v81 = vld [vmem:[%s0 + $0x1e0] sm:$0xff]
  %v82 = vld [vmem:[%s0 + $0x1e8] sm:$0xff]
  %v83 = vld [vmem:[%s0 + $0x1f0] sm:$0xff]
  %v84 = vld [vmem:[%s0 + $0x1f8] sm:$0xff]
  %85 = vxpose.xlu0.b32.start [1/16] %v21, 128
  %86 = vxpose.xlu0.b32.cont [2/16] %v22, 128
  %87 = vxpose.xlu0.b32.cont [3/16] %v23, 128
  %88 = vxpose.xlu0.b32.cont [4/16] %v24, 128
  %89 = vxpose.xlu0.b32.cont [5/16] %v25, 128
  %90 = vxpose.xlu0.b32.cont [6/16] %v26, 128
  %91 = vxpose.xlu0.b32.cont [7/16] %v27, 128
  %92 = vxpose.xlu0.b32.cont [8/16] %v28, 128
  %93 = vxpose.xlu0.b32.cont [9/16] %v29, 128
  %94 = vxpose.xlu0.b32.cont [10/16] %v30, 128
  %95 = vxpose.xlu0.b32.cont [11/16] %v31, 128
  %96 = vxpose.xlu0.b32.cont [12/16] %v32, 128
  %97 = vxpose.xlu0.b32.cont [13/16] %v33, 128
  %98 = vxpose.xlu0.b32.cont [14/16] %v34, 128
  %99 = vxpose.xlu0.b32.cont [15/16] %v35, 128
  %100 = vxpose.xlu0.b32.end [16/16] %v36, 128
  %v101 = vpop.trf.xlu0
  %v102 = vpop.trf.xlu0
  %v103 = vpop.trf.xlu0
  %v104 = vpop.trf.xlu0
  %v105 = vpop.trf.xlu0
  %v106 = vpop.trf.xlu0
  %v107 = vpop.trf.xlu0
  %v108 = vpop.trf.xlu0
  %v109 = vpop.trf.xlu0
  %v110 = vpop.trf.xlu0
  %v111 = vpop.trf.xlu0
  %v112 = vpop.trf.xlu0
  %v113 = vpop.trf.xlu0
  %v114 = vpop.trf.xlu0
  %v115 = vpop.trf.xlu0
  %v116 = vpop.trf.xlu0
  %117 = vxpose.xlu0.b32.start [1/16] %v37, 128
  %118 = vxpose.xlu0.b32.cont [2/16] %v38, 128
  %119 = vxpose.xlu0.b32.cont [3/16] %v39, 128
  %120 = vxpose.xlu0.b32.cont [4/16] %v40, 128
  %121 = vxpose.xlu0.b32.cont [5/16] %v41, 128
  %122 = vxpose.xlu0.b32.cont [6/16] %v42, 128
  %123 = vxpose.xlu0.b32.cont [7/16] %v43, 128
  %124 = vxpose.xlu0.b32.cont [8/16] %v44, 128
  %125 = vxpose.xlu0.b32.cont [9/16] %v45, 128
  %126 = vxpose.xlu0.b32.cont [10/16] %v46, 128
  %127 = vxpose.xlu0.b32.cont [11/16] %v47, 128
  %128 = vxpose.xlu0.b32.cont [12/16] %v48, 128
  %129 = vxpose.xlu0.b32.cont [13/16] %v49, 128
  %130 = vxpose.xlu0.b32.cont [14/16] %v50, 128
  %131 = vxpose.xlu0.b32.cont [15/16] %v51, 128
  %132 = vxpose.xlu0.b32.end [16/16] %v52, 128
  %v133 = vpop.trf.xlu0
  %v134 = vpop.trf.xlu0
  %v135 = vpop.trf.xlu0
  %v136 = vpop.trf.xlu0
  %v137 = vpop.trf.xlu0
  %v138 = vpop.trf.xlu0
  %v139 = vpop.trf.xlu0
  %v140 = vpop.trf.xlu0
  %v141 = vpop.trf.xlu0
  %v142 = vpop.trf.xlu0
  %v143 = vpop.trf.xlu0
  %v144 = vpop.trf.xlu0
  %v145 = vpop.trf.xlu0
  %v146 = vpop.trf.xlu0
  %v147 = vpop.trf.xlu0
  %v148 = vpop.trf.xlu0
  %149 = vxpose.xlu0.b32.start [1/16] %v53, 128
  %150 = vxpose.xlu0.b32.cont [2/16] %v54, 128
  %151 = vxpose.xlu0.b32.cont [3/16] %v55, 128
  %152 = vxpose.xlu0.b32.cont [4/16] %v56, 128
  %153 = vxpose.xlu0.b32.cont [5/16] %v57, 128
  %154 = vxpose.xlu0.b32.cont [6/16] %v58, 128
  %155 = vxpose.xlu0.b32.cont [7/16] %v59, 128
  %156 = vxpose.xlu0.b32.cont [8/16] %v60, 128
  %157 = vxpose.xlu0.b32.cont [9/16] %v61, 128
  %158 = vxpose.xlu0.b32.cont [10/16] %v62, 128
  %159 = vxpose.xlu0.b32.cont [11/16] %v63, 128
  %160 = vxpose.xlu0.b32.cont [12/16] %v64, 128
  %161 = vxpose.xlu0.b32.cont [13/16] %v65, 128
  %162 = vxpose.xlu0.b32.cont [14/16] %v66, 128
  %163 = vxpose.xlu0.b32.cont [15/16] %v67, 128
  %164 = vxpose.xlu0.b32.end [16/16] %v68, 128
  %v165 = vpop.trf.xlu0
  %v166 = vpop.trf.xlu0
  %v167 = vpop.trf.xlu0
  %v168 = vpop.trf.xlu0
  %v169 = vpop.trf.xlu0
  %v170 = vpop.trf.xlu0
  %v171 = vpop.trf.xlu0
  %v172 = vpop.trf.xlu0
  %v173 = vpop.trf.xlu0
  %v174 = vpop.trf.xlu0
  %v175 = vpop.trf.xlu0
  %v176 = vpop.trf.xlu0
  %v177 = vpop.trf.xlu0
  %v178 = vpop.trf.xlu0
  %v179 = vpop.trf.xlu0
  %v180 = vpop.trf.xlu0
  %181 = vxpose.xlu0.b32.start [1/16] %v69, 128
  %182 = vxpose.xlu0.b32.cont [2/16] %v70, 128
  %183 = vxpose.xlu0.b32.cont [3/16] %v71, 128
  %184 = vxpose.xlu0.b32.cont [4/16] %v72, 128
  %185 = vxpose.xlu0.b32.cont [5/16] %v73, 128
  %186 = vxpose.xlu0.b32.cont [6/16] %v74, 128
  %187 = vxpose.xlu0.b32.cont [7/16] %v75, 128
  %188 = vxpose.xlu0.b32.cont [8/16] %v76, 128
  %189 = vxpose.xlu0.b32.cont [9/16] %v77, 128
  %190 = vxpose.xlu0.b32.cont [10/16] %v78, 128
  %191 = vxpose.xlu0.b32.cont [11/16] %v79, 128
  %192 = vxpose.xlu0.b32.cont [12/16] %v80, 128
  %193 = vxpose.xlu0.b32.cont [13/16] %v81, 128
  %194 = vxpose.xlu0.b32.cont [14/16] %v82, 128
  %195 = vxpose.xlu0.b32.cont [15/16] %v83, 128
  %196 = vxpose.xlu0.b32.end [16/16] %v84, 128
  %v197 = vpop.trf.xlu0
  %v198 = vpop.trf.xlu0
  %v199 = vpop.trf.xlu0
  %v200 = vpop.trf.xlu0
  %v201 = vpop.trf.xlu0
  %v202 = vpop.trf.xlu0
  %v203 = vpop.trf.xlu0
  %v204 = vpop.trf.xlu0
  %v205 = vpop.trf.xlu0
  %v206 = vpop.trf.xlu0
  %v207 = vpop.trf.xlu0
  %v208 = vpop.trf.xlu0
  %v209 = vpop.trf.xlu0
  %v210 = vpop.trf.xlu0
  %v211 = vpop.trf.xlu0
  %v212 = vpop.trf.xlu0
  %v213 = vpack.c.bf16 %v102, %v101
  %v214 = vpack.c.bf16 %v134, %v133
  %v215 = vpack.c.bf16 %v166, %v165
  %v216 = vpack.c.bf16 %v198, %v197
  %v217 = vpack.c.bf16 %v104, %v103
  %v218 = vpack.c.bf16 %v136, %v135
  %v219 = vpack.c.bf16 %v168, %v167
  %v220 = vpack.c.bf16 %v200, %v199
  %v221 = vld [vmem:[%s1] sm:$0xf]
  %v222 = vld [vmem:[%s1 + $0x4] sm:$0xf]
  %v223 = vld [vmem:[%s1 + $0x8] sm:$0xf]
  %v224 = vld [vmem:[%s1 + $0xc] sm:$0xf]
  %v225 = vld [vmem:[%s2] sm:$0xff]
  %v226 = vld [vmem:[%s2 + $0x8] sm:$0xff]
  %v227 = vld [vmem:[%s2 + $0x10] sm:$0xff]
  %v228 = vld [vmem:[%s2 + $0x18] sm:$0xff]
  %230 = vset.pattern.permute.xlu0 0
  %231 = vperm.xlu0 %230, %v225
  %v232 = vpop.permute.xlu0 %231
  %235 = vset.pattern.permute.xlu0 0
  %236 = vperm.xlu0 %235, %v226
  %v237 = vpop.permute.xlu0 %236
  %240 = vset.pattern.permute.xlu0 0
  %241 = vperm.xlu0 %240, %v227
  %v242 = vpop.permute.xlu0 %241
  %245 = vset.pattern.permute.xlu0 0
  %246 = vperm.xlu0 %245, %v228
  %v247 = vpop.permute.xlu0 %246
  %v253 = vunpack.c.l.b16 %v221
  %v254 = vunpack.c.l.b16 %v222
  %v255 = vunpack.c.l.b16 %v223
  %v256 = vunpack.c.l.b16 %v224
  %v257 = vpack.c.b16 %v254, %v253
  %v258 = vpack.c.b16 %v256, %v255
  %vm259 = vcmask 261120
  %v261 = vsel %vm259, %v257, 0
  %v264 = vsel %vm259, %v258, 0
  %266 = vmatprep.subr.bf16.mxu0 %v214
  %267 = vmatpush1.bf16.msra.mxu0 %v213
  %268 = vmatprep.subr.bf16.mxu0 %v218
  %269 = vmatpush1.bf16.msra.mxu0 %v217
  %270 = vmatprep.subr.bf16.mxu0 0
  %271 = vmatpush1.bf16.msra.mxu0 0
  %272 = vmatprep.subr.bf16.mxu0 0
  %273 = vmatpush1.bf16.msra.mxu0 0
  %274 = vmatprep.subr.bf16.mxu0 0
  %275 = vmatpush1.bf16.msra.mxu0 0
  %276 = vmatprep.subr.bf16.mxu0 0
  %277 = vmatpush1.bf16.msra.mxu0 0
  %278 = vmatprep.subr.bf16.mxu0 0
  %279 = vmatpush1.bf16.msra.mxu0 0
  %280 = vmatprep.subr.bf16.mxu0 0
  %281 = vmatpush1.bf16.msra.mxu0 0
  %282 = vmatprep.subr.bf16.mxu0 0
  %283 = vmatpush1.bf16.msra.mxu0 0
  %284 = vmatprep.subr.bf16.mxu0 0
  %285 = vmatpush1.bf16.msra.mxu0 0
  %286 = vmatprep.subr.bf16.mxu0 0
  %287 = vmatpush1.bf16.msra.mxu0 0
  %288 = vmatprep.subr.bf16.mxu0 0
  %289 = vmatpush1.bf16.msra.mxu0 0
  %290 = vmatprep.subr.bf16.mxu0 0
  %291 = vmatpush1.bf16.msra.mxu0 0
  %292 = vmatprep.subr.bf16.mxu0 0
  %293 = vmatpush1.bf16.msra.mxu0 0
  %294 = vmatprep.subr.bf16.mxu0 0
  %295 = vmatpush1.bf16.msra.mxu0 0
  %296 = vmatprep.subr.bf16.mxu0 0
  %297 = vmatpush1.bf16.msra.mxu0 0
  %298 = vmatprep.mubr.bf16.mxu0 0
  %299 = vmatmul.mubr.bf16.gmra.mrb[0].mxu0 %v261
  %v300 = vpop.f32.mrb[0].mxu0
  %v301 = vadd.f32 %v232, %v300
  %v302 = vpop.f32.mrb[0].mxu0
  %v303 = vadd.f32 %v232, %v302
  %v304 = vpop.f32.mrb[0].mxu0
  %v305 = vadd.f32 %v237, %v304
  %v306 = vpop.f32.mrb[0].mxu0
  %v307 = vadd.f32 %v237, %v306
  %308 = vmatprep.mubr.bf16.mxu0 0
  %309 = vmatmul.mubr.bf16.gmra.mrb[0].mxu0 %v264
  %v310 = vpop.f32.mrb[0].mxu0
  %v311 = vadd.f32 %v242, %v310
  %v312 = vpop.f32.mrb[0].mxu0
  %v313 = vadd.f32 %v242, %v312
  %v314 = vpop.f32.mrb[0].mxu0
  %v315 = vadd.f32 %v247, %v314
  %v316 = vpop.f32.mrb[0].mxu0
  %v317 = vadd.f32 %v247, %v316
  %318 = vdwg.mxu0
  %319 = vmatprep.subr.bf16.mxu0 %v216
  %320 = vmatpush1.bf16.msra.mxu0 %v215
  %321 = vmatprep.subr.bf16.mxu0 %v220
  %322 = vmatpush1.bf16.msra.mxu0 %v219
  %323 = vmatprep.subr.bf16.mxu0 0
  %324 = vmatpush1.bf16.msra.mxu0 0
  %325 = vmatprep.subr.bf16.mxu0 0
  %326 = vmatpush1.bf16.msra.mxu0 0
  %327 = vmatprep.subr.bf16.mxu0 0
  %328 = vmatpush1.bf16.msra.mxu0 0
  %329 = vmatprep.subr.bf16.mxu0 0
  %330 = vmatpush1.bf16.msra.mxu0 0
  %331 = vmatprep.subr.bf16.mxu0 0
  %332 = vmatpush1.bf16.msra.mxu0 0
  %333 = vmatprep.subr.bf16.mxu0 0
  %334 = vmatpush1.bf16.msra.mxu0 0
  %335 = vmatprep.subr.bf16.mxu0 0
  %336 = vmatpush1.bf16.msra.mxu0 0
  %337 = vmatprep.subr.bf16.mxu0 0
  %338 = vmatpush1.bf16.msra.mxu0 0
  %339 = vmatprep.subr.bf16.mxu0 0
  %340 = vmatpush1.bf16.msra.mxu0 0
  %341 = vmatprep.subr.bf16.mxu0 0
  %342 = vmatpush1.bf16.msra.mxu0 0
  %343 = vmatprep.subr.bf16.mxu0 0
  %344 = vmatpush1.bf16.msra.mxu0 0
  %345 = vmatprep.subr.bf16.mxu0 0
  %346 = vmatpush1.bf16.msra.mxu0 0
  %347 = vmatprep.subr.bf16.mxu0 0
  %348 = vmatpush1.bf16.msra.mxu0 0
  %349 = vmatprep.subr.bf16.mxu0 0
  %350 = vmatpush1.bf16.msra.mxu0 0
  %351 = vmatprep.mubr.bf16.mxu0 0
  %352 = vmatmul.mubr.bf16.gmra.mrb[0].mxu0 %v261
  %v353 = vpop.f32.mrb[0].mxu0
  %v354 = vadd.f32 %v232, %v353
  %v355 = vpop.f32.mrb[0].mxu0
  %v356 = vadd.f32 %v232, %v355
  %v357 = vpop.f32.mrb[0].mxu0
  %v358 = vadd.f32 %v237, %v357
  %v359 = vpop.f32.mrb[0].mxu0
  %v360 = vadd.f32 %v237, %v359
  %361 = vmatprep.mubr.bf16.mxu0 0
  %362 = vmatmul.mubr.bf16.gmra.mrb[0].mxu0 %v264
  %v363 = vpop.f32.mrb[0].mxu0
  %v364 = vadd.f32 %v242, %v363
  %v365 = vpop.f32.mrb[0].mxu0
  %v366 = vadd.f32 %v242, %v365
  %v367 = vpop.f32.mrb[0].mxu0
  %v368 = vadd.f32 %v247, %v367
  %v369 = vpop.f32.mrb[0].mxu0
  %v370 = vadd.f32 %v247, %v369
  %371 = vdwg.mxu0
  %v372 = vmul.f32 %v301, 0.5
  %v373 = vmul.f32 %v303, 0.5
  %v374 = vmul.f32 %v354, 0.5
  %v375 = vmul.f32 %v356, 0.5
  %v376 = vmul.f32 %v305, 0.5
  %v377 = vmul.f32 %v307, 0.5
  %v378 = vmul.f32 %v358, 0.5
  %v379 = vmul.f32 %v360, 0.5
  %v380 = vmul.f32 %v311, 0.5
  %v381 = vmul.f32 %v313, 0.5
  %v382 = vmul.f32 %v364, 0.5
  %v383 = vmul.f32 %v366, 0.5
  %v384 = vmul.f32 %v315, 0.5
  %v385 = vmul.f32 %v317, 0.5
  %v386 = vmul.f32 %v368, 0.5
  %v387 = vmul.f32 %v370, 0.5
  %v388 = vmul.f32 %v301, 0.70710677
  %v389 = vmul.f32 %v303, 0.70710677
  %v390 = vmul.f32 %v354, 0.70710677
  %v391 = vmul.f32 %v356, 0.70710677
  %v392 = vmul.f32 %v305, 0.70710677
  %v393 = vmul.f32 %v307, 0.70710677
  %v394 = vmul.f32 %v358, 0.70710677
  %v395 = vmul.f32 %v360, 0.70710677
  %v396 = vmul.f32 %v311, 0.70710677
  %v397 = vmul.f32 %v313, 0.70710677
  %v398 = vmul.f32 %v364, 0.70710677
  %v399 = vmul.f32 %v366, 0.70710677
  %v400 = vmul.f32 %v315, 0.70710677
  %v401 = vmul.f32 %v317, 0.70710677
  %v402 = vmul.f32 %v368, 0.70710677
  %v403 = vmul.f32 %v370, 0.70710677
  %v404 = verf.f32.pop %v388
  %v405 = verf.f32.pop %v389
  %v406 = verf.f32.pop %v390
  %v407 = verf.f32.pop %v391
  %v408 = verf.f32.pop %v392
  %v409 = verf.f32.pop %v393
  %v410 = verf.f32.pop %v394
  %v411 = verf.f32.pop %v395
  %v412 = verf.f32.pop %v396
  %v413 = verf.f32.pop %v397
  %v414 = verf.f32.pop %v398
  %v415 = verf.f32.pop %v399
  %v416 = verf.f32.pop %v400
  %v417 = verf.f32.pop %v401
  %v418 = verf.f32.pop %v402
  %v419 = verf.f32.pop %v403
  %v420 = vadd.f32 %v404, 1.0
  %v421 = vadd.f32 %v405, 1.0
  %v422 = vadd.f32 %v406, 1.0
  %v423 = vadd.f32 %v407, 1.0
  %v424 = vadd.f32 %v408, 1.0
  %v425 = vadd.f32 %v409, 1.0
  %v426 = vadd.f32 %v410, 1.0
  %v427 = vadd.f32 %v411, 1.0
  %v428 = vadd.f32 %v412, 1.0
  %v429 = vadd.f32 %v413, 1.0
  %v430 = vadd.f32 %v414, 1.0
  %v431 = vadd.f32 %v415, 1.0
  %v432 = vadd.f32 %v416, 1.0
  %v433 = vadd.f32 %v417, 1.0
  %v434 = vadd.f32 %v418, 1.0
  %v435 = vadd.f32 %v419, 1.0
  %v436 = vmul.f32 %v372, %v420
  %v437 = vmul.f32 %v373, %v421
  %v438 = vmul.f32 %v374, %v422
  %v439 = vmul.f32 %v375, %v423
  %v440 = vmul.f32 %v376, %v424
  %v441 = vmul.f32 %v377, %v425
  %v442 = vmul.f32 %v378, %v426
  %v443 = vmul.f32 %v379, %v427
  %v444 = vmul.f32 %v380, %v428
  %v445 = vmul.f32 %v381, %v429
  %v446 = vmul.f32 %v382, %v430
  %v447 = vmul.f32 %v383, %v431
  %v448 = vmul.f32 %v384, %v432
  %v449 = vmul.f32 %v385, %v433
  %v450 = vmul.f32 %v386, %v434
  %v451 = vmul.f32 %v387, %v435
  %v452 = vadd.f32 %v436, %v440
  %v453 = vadd.f32 %v452, %v444
  %v454 = vadd.f32 %v453, %v448
  %v455 = vrot.slane %v454, 4
  %v456 = vadd.f32 %v454, %v455
  %v457 = vrot.slane %v456, 2
  %v458 = vadd.f32 %v456, %v457
  %v459 = vrot.slane %v458, 1
  %v460 = vadd.f32 %v458, %v459
  %v461 = vadd.f32 %v437, %v441
  %v462 = vadd.f32 %v461, %v445
  %v463 = vadd.f32 %v462, %v449
  %v464 = vrot.slane %v463, 4
  %v465 = vadd.f32 %v463, %v464
  %v466 = vrot.slane %v465, 2
  %v467 = vadd.f32 %v465, %v466
  %v468 = vrot.slane %v467, 1
  %v469 = vadd.f32 %v467, %v468
  %v470 = vadd.f32 %v438, %v442
  %v471 = vadd.f32 %v470, %v446
  %v472 = vadd.f32 %v471, %v450
  %v473 = vrot.slane %v472, 4
  %v474 = vadd.f32 %v472, %v473
  %v475 = vrot.slane %v474, 2
  %v476 = vadd.f32 %v474, %v475
  %v477 = vrot.slane %v476, 1
  %v478 = vadd.f32 %v476, %v477
  %v479 = vadd.f32 %v439, %v443
  %v480 = vadd.f32 %v479, %v447
  %v481 = vadd.f32 %v480, %v451
  %v482 = vrot.slane %v481, 4
  %v483 = vadd.f32 %v481, %v482
  %v484 = vrot.slane %v483, 2
  %v485 = vadd.f32 %v483, %v484
  %v486 = vrot.slane %v485, 1
  %v487 = vadd.f32 %v485, %v486
  %v488 = vmul.f32 %v460, 0.03125
  %v489 = vmul.f32 %v469, 0.03125
  %v490 = vmul.f32 %v478, 0.03125
  %v491 = vmul.f32 %v487, 0.03125
  %v492 = vmul.f32 %v436, %v436
  %v493 = vmul.f32 %v437, %v437
  %v494 = vmul.f32 %v438, %v438
  %v495 = vmul.f32 %v439, %v439
  %v496 = vmul.f32 %v440, %v440
  %v497 = vmul.f32 %v441, %v441
  %v498 = vmul.f32 %v442, %v442
  %v499 = vmul.f32 %v443, %v443
  %v500 = vmul.f32 %v444, %v444
  %v501 = vmul.f32 %v445, %v445
  %v502 = vmul.f32 %v446, %v446
  %v503 = vmul.f32 %v447, %v447
  %v504 = vmul.f32 %v448, %v448
  %v505 = vmul.f32 %v449, %v449
  %v506 = vmul.f32 %v450, %v450
  %v507 = vmul.f32 %v451, %v451
  %v508 = vadd.f32 %v492, %v496
  %v509 = vadd.f32 %v508, %v500
  %v510 = vadd.f32 %v509, %v504
  %v511 = vrot.slane %v510, 4
  %v512 = vadd.f32 %v510, %v511
  %v513 = vrot.slane %v512, 2
  %v514 = vadd.f32 %v512, %v513
  %v515 = vrot.slane %v514, 1
  %v516 = vadd.f32 %v514, %v515
  %v517 = vadd.f32 %v493, %v497
  %v518 = vadd.f32 %v517, %v501
  %v519 = vadd.f32 %v518, %v505
  %v520 = vrot.slane %v519, 4
  %v521 = vadd.f32 %v519, %v520
  %v522 = vrot.slane %v521, 2
  %v523 = vadd.f32 %v521, %v522
  %v524 = vrot.slane %v523, 1
  %v525 = vadd.f32 %v523, %v524
  %v526 = vadd.f32 %v494, %v498
  %v527 = vadd.f32 %v526, %v502
  %v528 = vadd.f32 %v527, %v506
  %v529 = vrot.slane %v528, 4
  %v530 = vadd.f32 %v528, %v529
  %v531 = vrot.slane %v530, 2
  %v532 = vadd.f32 %v530, %v531
  %v533 = vrot.slane %v532, 1
  %v534 = vadd.f32 %v532, %v533
  %v535 = vadd.f32 %v495, %v499
  %v536 = vadd.f32 %v535, %v503
  %v537 = vadd.f32 %v536, %v507
  %v538 = vrot.slane %v537, 4
  %v539 = vadd.f32 %v537, %v538
  %v540 = vrot.slane %v539, 2
  %v541 = vadd.f32 %v539, %v540
  %v542 = vrot.slane %v541, 1
  %v543 = vadd.f32 %v541, %v542
  %v544 = vmul.f32 %v516, 0.03125
  %v545 = vmul.f32 %v525, 0.03125
  %v546 = vmul.f32 %v534, 0.03125
  %v547 = vmul.f32 %v543, 0.03125
  %v548 = vmul.f32 %v488, %v488
  %v549 = vmul.f32 %v489, %v489
  %v550 = vmul.f32 %v490, %v490
  %v551 = vmul.f32 %v491, %v491
  %v552 = vsub.f32 %v544, %v548
  %v553 = vsub.f32 %v545, %v549
  %v554 = vsub.f32 %v546, %v550
  %v555 = vsub.f32 %v547, %v551
  %v556 = vmax.f32 %v552, 0.0
  %v557 = vmax.f32 %v553, 0.0
  %v558 = vmax.f32 %v554, 0.0
  %v559 = vmax.f32 %v555, 0.0
  %v560 = vsub.f32 %v436, %v488
  %v561 = vsub.f32 %v437, %v489
  %v562 = vsub.f32 %v438, %v490
  %v563 = vsub.f32 %v439, %v491
  %v564 = vsub.f32 %v440, %v488
  %v565 = vsub.f32 %v441, %v489
  %v566 = vsub.f32 %v442, %v490
  %v567 = vsub.f32 %v443, %v491
  %v568 = vsub.f32 %v444, %v488
  %v569 = vsub.f32 %v445, %v489
  %v570 = vsub.f32 %v446, %v490
  %v571 = vsub.f32 %v447, %v491
  %v572 = vsub.f32 %v448, %v488
  %v573 = vsub.f32 %v449, %v489
  %v574 = vsub.f32 %v450, %v490
  %v575 = vsub.f32 %v451, %v491
  %v576 = vadd.f32 %v556, 1e-06
  %v577 = vadd.f32 %v557, 1e-06
  %v578 = vadd.f32 %v558, 1e-06
  %v579 = vadd.f32 %v559, 1e-06
  %v580 = vrsqrt.pop %v576
  %v581 = vrsqrt.pop %v577
  %v582 = vrsqrt.pop %v578
  %v583 = vrsqrt.pop %v579
  %v584 = vmul.f32 %v560, %v580
  %v585 = vmul.f32 %v561, %v581
  %v586 = vmul.f32 %v562, %v582
  %v587 = vmul.f32 %v563, %v583
  %v588 = vmul.f32 %v564, %v580
  %v589 = vmul.f32 %v565, %v581
  %v590 = vmul.f32 %v566, %v582
  %v591 = vmul.f32 %v567, %v583
  %v592 = vmul.f32 %v568, %v580
  %v593 = vmul.f32 %v569, %v581
  %v594 = vmul.f32 %v570, %v582
  %v595 = vmul.f32 %v571, %v583
  %v596 = vmul.f32 %v572, %v580
  %v597 = vmul.f32 %v573, %v581
  %v598 = vmul.f32 %v574, %v582
  %v599 = vmul.f32 %v575, %v583
  %v600 = vld [vmem:[%s3] sm:$0xf]
  %v601 = vld [vmem:[%s3 + $0x4] sm:$0xf]
  %v602 = vld [vmem:[%s3 + $0x8] sm:$0xf]
  %v603 = vld [vmem:[%s3 + $0xc] sm:$0xf]
  %v604 = vpack.c.bf16 %v588, %v584
  %v605 = vpack.c.bf16 %v589, %v585
  %v606 = vpack.c.bf16 %v590, %v586
  %v607 = vpack.c.bf16 %v591, %v587
  %v608 = vpack.c.bf16 %v596, %v592
  %v609 = vpack.c.bf16 %v597, %v593
  %v610 = vpack.c.bf16 %v598, %v594
  %v611 = vpack.c.bf16 %v599, %v595
  %v612 = vld [vmem:[%s4] sm:$0xff]
  %v613 = vld [vmem:[%s4 + $0x8] sm:$0xff]
  %v614 = vld [vmem:[%s4 + $0x10] sm:$0xff]
  %v615 = vld [vmem:[%s4 + $0x18] sm:$0xff]
  %617 = vset.pattern.permute.xlu0 0
  %618 = vperm.xlu0 %617, %v612
  %v619 = vpop.permute.xlu0 %618
  %622 = vset.pattern.permute.xlu0 0
  %623 = vperm.xlu0 %622, %v613
  %v624 = vpop.permute.xlu0 %623
  %627 = vset.pattern.permute.xlu0 0
  %628 = vperm.xlu0 %627, %v614
  %v629 = vpop.permute.xlu0 %628
  %632 = vset.pattern.permute.xlu0 0
  %633 = vperm.xlu0 %632, %v615
  %v634 = vpop.permute.xlu0 %633
  %v640 = vunpack.c.l.b16 %v600
  %v641 = vunpack.c.l.b16 %v601
  %v642 = vunpack.c.l.b16 %v602
  %v643 = vunpack.c.l.b16 %v603
  %v644 = vpack.c.b16 %v641, %v640
  %v645 = vpack.c.b16 %v643, %v642
  %v647 = vsel %vm259, %v644, 0
  %v650 = vsel %vm259, %v645, 0
  %652 = vmatprep.subr.bf16.mxu0 %v605
  %653 = vmatpush1.bf16.msra.mxu0 %v604
  %654 = vmatprep.subr.bf16.mxu0 %v609
  %655 = vmatpush1.bf16.msra.mxu0 %v608
  %656 = vmatprep.subr.bf16.mxu0 0
  %657 = vmatpush1.bf16.msra.mxu0 0
  %658 = vmatprep.subr.bf16.mxu0 0
  %659 = vmatpush1.bf16.msra.mxu0 0
  %660 = vmatprep.subr.bf16.mxu0 0
  %661 = vmatpush1.bf16.msra.mxu0 0
  %662 = vmatprep.subr.bf16.mxu0 0
  %663 = vmatpush1.bf16.msra.mxu0 0
  %664 = vmatprep.subr.bf16.mxu0 0
  %665 = vmatpush1.bf16.msra.mxu0 0
  %666 = vmatprep.subr.bf16.mxu0 0
  %667 = vmatpush1.bf16.msra.mxu0 0
  %668 = vmatprep.subr.bf16.mxu0 0
  %669 = vmatpush1.bf16.msra.mxu0 0
  %670 = vmatprep.subr.bf16.mxu0 0
  %671 = vmatpush1.bf16.msra.mxu0 0
  %672 = vmatprep.subr.bf16.mxu0 0
  %673 = vmatpush1.bf16.msra.mxu0 0
  %674 = vmatprep.subr.bf16.mxu0 0
  %675 = vmatpush1.bf16.msra.mxu0 0
  %676 = vmatprep.subr.bf16.mxu0 0
  %677 = vmatpush1.bf16.msra.mxu0 0
  %678 = vmatprep.subr.bf16.mxu0 0
  %679 = vmatpush1.bf16.msra.mxu0 0
  %680 = vmatprep.subr.bf16.mxu0 0
  %681 = vmatpush1.bf16.msra.mxu0 0
  %682 = vmatprep.subr.bf16.mxu0 0
  %683 = vmatpush1.bf16.msra.mxu0 0
  %684 = vmatprep.mubr.bf16.mxu0 0
  %685 = vmatmul.mubr.bf16.gmra.mrb[0].mxu0 %v647
  %v686 = vpop.f32.mrb[0].mxu0
  %v687 = vadd.f32 %v619, %v686
  %v688 = vpop.f32.mrb[0].mxu0
  %v689 = vadd.f32 %v619, %v688
  %v690 = vpop.f32.mrb[0].mxu0
  %v691 = vadd.f32 %v624, %v690
  %v692 = vpop.f32.mrb[0].mxu0
  %v693 = vadd.f32 %v624, %v692
  %694 = vmatprep.mubr.bf16.mxu0 0
  %695 = vmatmul.mubr.bf16.gmra.mrb[0].mxu0 %v650
  %v696 = vpop.f32.mrb[0].mxu0
  %v697 = vadd.f32 %v629, %v696
  %v698 = vpop.f32.mrb[0].mxu0
  %v699 = vadd.f32 %v629, %v698
  %v700 = vpop.f32.mrb[0].mxu0
  %v701 = vadd.f32 %v634, %v700
  %v702 = vpop.f32.mrb[0].mxu0
  %v703 = vadd.f32 %v634, %v702
  %704 = vdwg.mxu0
  %705 = vmatprep.subr.bf16.mxu0 %v607
  %706 = vmatpush1.bf16.msra.mxu0 %v606
  %707 = vmatprep.subr.bf16.mxu0 %v611
  %708 = vmatpush1.bf16.msra.mxu0 %v610
  %709 = vmatprep.subr.bf16.mxu0 0
  %710 = vmatpush1.bf16.msra.mxu0 0
  %711 = vmatprep.subr.bf16.mxu0 0
  %712 = vmatpush1.bf16.msra.mxu0 0
  %713 = vmatprep.subr.bf16.mxu0 0
  %714 = vmatpush1.bf16.msra.mxu0 0
  %715 = vmatprep.subr.bf16.mxu0 0
  %716 = vmatpush1.bf16.msra.mxu0 0
  %717 = vmatprep.subr.bf16.mxu0 0
  %718 = vmatpush1.bf16.msra.mxu0 0
  %719 = vmatprep.subr.bf16.mxu0 0
  %720 = vmatpush1.bf16.msra.mxu0 0
  %721 = vmatprep.subr.bf16.mxu0 0
  %722 = vmatpush1.bf16.msra.mxu0 0
  %723 = vmatprep.subr.bf16.mxu0 0
  %724 = vmatpush1.bf16.msra.mxu0 0
  %725 = vmatprep.subr.bf16.mxu0 0
  %726 = vmatpush1.bf16.msra.mxu0 0
  %727 = vmatprep.subr.bf16.mxu0 0
  %728 = vmatpush1.bf16.msra.mxu0 0
  %729 = vmatprep.subr.bf16.mxu0 0
  %730 = vmatpush1.bf16.msra.mxu0 0
  %731 = vmatprep.subr.bf16.mxu0 0
  %732 = vmatpush1.bf16.msra.mxu0 0
  %733 = vmatprep.subr.bf16.mxu0 0
  %734 = vmatpush1.bf16.msra.mxu0 0
  %735 = vmatprep.subr.bf16.mxu0 0
  %736 = vmatpush1.bf16.msra.mxu0 0
  %737 = vmatprep.mubr.bf16.mxu0 0
  %738 = vmatmul.mubr.bf16.gmra.mrb[0].mxu0 %v647
  %v739 = vpop.f32.mrb[0].mxu0
  %v740 = vadd.f32 %v619, %v739
  %v741 = vpop.f32.mrb[0].mxu0
  %v742 = vadd.f32 %v619, %v741
  %v743 = vpop.f32.mrb[0].mxu0
  %v744 = vadd.f32 %v624, %v743
  %v745 = vpop.f32.mrb[0].mxu0
  %v746 = vadd.f32 %v624, %v745
  %747 = vmatprep.mubr.bf16.mxu0 0
  %748 = vmatmul.mubr.bf16.gmra.mrb[0].mxu0 %v650
  %v749 = vpop.f32.mrb[0].mxu0
  %v750 = vadd.f32 %v629, %v749
  %v751 = vpop.f32.mrb[0].mxu0
  %v752 = vadd.f32 %v629, %v751
  %v753 = vpop.f32.mrb[0].mxu0
  %v754 = vadd.f32 %v634, %v753
  %v755 = vpop.f32.mrb[0].mxu0
  %v756 = vadd.f32 %v634, %v755
  %757 = vdwg.mxu0
  %758 = vxpose.xlu0.b32.start [1/16] %v687, 128
  %759 = vxpose.xlu0.b32.cont [2/16] %v691, 128
  %760 = vxpose.xlu0.b32.cont [3/16] %v697, 128
  %761 = vxpose.xlu0.b32.cont [4/16] %v701, 128
  %762 = vxpose.xlu0.b32.cont [5/16] 0.0, 128
  %763 = vxpose.xlu0.b32.cont [6/16] 0.0, 128
  %764 = vxpose.xlu0.b32.cont [7/16] 0.0, 128
  %765 = vxpose.xlu0.b32.cont [8/16] 0.0, 128
  %766 = vxpose.xlu0.b32.cont [9/16] 0.0, 128
  %767 = vxpose.xlu0.b32.cont [10/16] 0.0, 128
  %768 = vxpose.xlu0.b32.cont [11/16] 0.0, 128
  %769 = vxpose.xlu0.b32.cont [12/16] 0.0, 128
  %770 = vxpose.xlu0.b32.cont [13/16] 0.0, 128
  %771 = vxpose.xlu0.b32.cont [14/16] 0.0, 128
  %772 = vxpose.xlu0.b32.cont [15/16] 0.0, 128
  %773 = vxpose.xlu0.b32.end [16/16] 0.0, 128
  %v774 = vpop.trf.xlu0
  %v775 = vpop.trf.xlu0
  %v776 = vpop.trf.xlu0
  %v777 = vpop.trf.xlu0
  %v778 = vpop.trf.xlu0
  %v779 = vpop.trf.xlu0
  %v780 = vpop.trf.xlu0
  %v781 = vpop.trf.xlu0
  %v782 = vpop.trf.xlu0
  %v783 = vpop.trf.xlu0
  %v784 = vpop.trf.xlu0
  %v785 = vpop.trf.xlu0
  %v786 = vpop.trf.xlu0
  %v787 = vpop.trf.xlu0
  %v788 = vpop.trf.xlu0
  %v789 = vpop.trf.xlu0
  %790 = vxpose.xlu0.b32.start [1/16] %v689, 128
  %791 = vxpose.xlu0.b32.cont [2/16] %v693, 128
  %792 = vxpose.xlu0.b32.cont [3/16] %v699, 128
  %793 = vxpose.xlu0.b32.cont [4/16] %v703, 128
  %794 = vxpose.xlu0.b32.cont [5/16] 0.0, 128
  %795 = vxpose.xlu0.b32.cont [6/16] 0.0, 128
  %796 = vxpose.xlu0.b32.cont [7/16] 0.0, 128
  %797 = vxpose.xlu0.b32.cont [8/16] 0.0, 128
  %798 = vxpose.xlu0.b32.cont [9/16] 0.0, 128
  %799 = vxpose.xlu0.b32.cont [10/16] 0.0, 128
  %800 = vxpose.xlu0.b32.cont [11/16] 0.0, 128
  %801 = vxpose.xlu0.b32.cont [12/16] 0.0, 128
  %802 = vxpose.xlu0.b32.cont [13/16] 0.0, 128
  %803 = vxpose.xlu0.b32.cont [14/16] 0.0, 128
  %804 = vxpose.xlu0.b32.cont [15/16] 0.0, 128
  %805 = vxpose.xlu0.b32.end [16/16] 0.0, 128
  %v806 = vpop.trf.xlu0
  %v807 = vpop.trf.xlu0
  %v808 = vpop.trf.xlu0
  %v809 = vpop.trf.xlu0
  %v810 = vpop.trf.xlu0
  %v811 = vpop.trf.xlu0
  %v812 = vpop.trf.xlu0
  %v813 = vpop.trf.xlu0
  %v814 = vpop.trf.xlu0
  %v815 = vpop.trf.xlu0
  %v816 = vpop.trf.xlu0
  %v817 = vpop.trf.xlu0
  %v818 = vpop.trf.xlu0
  %v819 = vpop.trf.xlu0
  %v820 = vpop.trf.xlu0
  %v821 = vpop.trf.xlu0
  %822 = vxpose.xlu0.b32.start [1/16] %v740, 128
  %823 = vxpose.xlu0.b32.cont [2/16] %v744, 128
  %824 = vxpose.xlu0.b32.cont [3/16] %v750, 128
  %825 = vxpose.xlu0.b32.cont [4/16] %v754, 128
  %826 = vxpose.xlu0.b32.cont [5/16] 0.0, 128
  %827 = vxpose.xlu0.b32.cont [6/16] 0.0, 128
  %828 = vxpose.xlu0.b32.cont [7/16] 0.0, 128
  %829 = vxpose.xlu0.b32.cont [8/16] 0.0, 128
  %830 = vxpose.xlu0.b32.cont [9/16] 0.0, 128
  %831 = vxpose.xlu0.b32.cont [10/16] 0.0, 128
  %832 = vxpose.xlu0.b32.cont [11/16] 0.0, 128
  %833 = vxpose.xlu0.b32.cont [12/16] 0.0, 128
  %834 = vxpose.xlu0.b32.cont [13/16] 0.0, 128
  %835 = vxpose.xlu0.b32.cont [14/16] 0.0, 128
  %836 = vxpose.xlu0.b32.cont [15/16] 0.0, 128
  %837 = vxpose.xlu0.b32.end [16/16] 0.0, 128
  %v838 = vpop.trf.xlu0
  %v839 = vpop.trf.xlu0
  %v840 = vpop.trf.xlu0
  %v841 = vpop.trf.xlu0
  %v842 = vpop.trf.xlu0
  %v843 = vpop.trf.xlu0
  %v844 = vpop.trf.xlu0
  %v845 = vpop.trf.xlu0
  %v846 = vpop.trf.xlu0
  %v847 = vpop.trf.xlu0
  %v848 = vpop.trf.xlu0
  %v849 = vpop.trf.xlu0
  %v850 = vpop.trf.xlu0
  %v851 = vpop.trf.xlu0
  %v852 = vpop.trf.xlu0
  %v853 = vpop.trf.xlu0
  %854 = vxpose.xlu0.b32.start [1/16] %v742, 128
  %855 = vxpose.xlu0.b32.cont [2/16] %v746, 128
  %856 = vxpose.xlu0.b32.cont [3/16] %v752, 128
  %857 = vxpose.xlu0.b32.cont [4/16] %v756, 128
  %858 = vxpose.xlu0.b32.cont [5/16] 0.0, 128
  %859 = vxpose.xlu0.b32.cont [6/16] 0.0, 128
  %860 = vxpose.xlu0.b32.cont [7/16] 0.0, 128
  %861 = vxpose.xlu0.b32.cont [8/16] 0.0, 128
  %862 = vxpose.xlu0.b32.cont [9/16] 0.0, 128
  %863 = vxpose.xlu0.b32.cont [10/16] 0.0, 128
  %864 = vxpose.xlu0.b32.cont [11/16] 0.0, 128
  %865 = vxpose.xlu0.b32.cont [12/16] 0.0, 128
  %866 = vxpose.xlu0.b32.cont [13/16] 0.0, 128
  %867 = vxpose.xlu0.b32.cont [14/16] 0.0, 128
  %868 = vxpose.xlu0.b32.cont [15/16] 0.0, 128
  %869 = vxpose.xlu0.b32.end [16/16] 0.0, 128
  %v870 = vpop.trf.xlu0
  %v871 = vpop.trf.xlu0
  %v872 = vpop.trf.xlu0
  %v873 = vpop.trf.xlu0
  %v874 = vpop.trf.xlu0
  %v875 = vpop.trf.xlu0
  %v876 = vpop.trf.xlu0
  %v877 = vpop.trf.xlu0
  %v878 = vpop.trf.xlu0
  %v879 = vpop.trf.xlu0
  %v880 = vpop.trf.xlu0
  %v881 = vpop.trf.xlu0
  %v882 = vpop.trf.xlu0
  %v883 = vpop.trf.xlu0
  %v884 = vpop.trf.xlu0
  %v885 = vpop.trf.xlu0
  %886 = vst.msk [vmem:[%s5] sm:$0xff] %vm259, %v774
  %887 = vst.msk [vmem:[%s5 + $0x8] sm:$0xff] %vm259, %v775
  %888 = vst.msk [vmem:[%s5 + $0x10] sm:$0xff] %vm259, %v776
  %889 = vst.msk [vmem:[%s5 + $0x18] sm:$0xff] %vm259, %v777
  %890 = vst.msk [vmem:[%s5 + $0x20] sm:$0xff] %vm259, %v778
  %891 = vst.msk [vmem:[%s5 + $0x28] sm:$0xff] %vm259, %v779
  %892 = vst.msk [vmem:[%s5 + $0x30] sm:$0xff] %vm259, %v780
  %893 = vst.msk [vmem:[%s5 + $0x38] sm:$0xff] %vm259, %v781
  %894 = vst.msk [vmem:[%s5 + $0x40] sm:$0xff] %vm259, %v782
  %895 = vst.msk [vmem:[%s5 + $0x48] sm:$0xff] %vm259, %v783
  %896 = vst.msk [vmem:[%s5 + $0x50] sm:$0xff] %vm259, %v784
  %897 = vst.msk [vmem:[%s5 + $0x58] sm:$0xff] %vm259, %v785
  %898 = vst.msk [vmem:[%s5 + $0x60] sm:$0xff] %vm259, %v786
  %899 = vst.msk [vmem:[%s5 + $0x68] sm:$0xff] %vm259, %v787
  %900 = vst.msk [vmem:[%s5 + $0x70] sm:$0xff] %vm259, %v788
  %901 = vst.msk [vmem:[%s5 + $0x78] sm:$0xff] %vm259, %v789
  %902 = vst.msk [vmem:[%s5 + $0x80] sm:$0xff] %vm259, %v806
  %903 = vst.msk [vmem:[%s5 + $0x88] sm:$0xff] %vm259, %v807
  %904 = vst.msk [vmem:[%s5 + $0x90] sm:$0xff] %vm259, %v808
  %905 = vst.msk [vmem:[%s5 + $0x98] sm:$0xff] %vm259, %v809
  %906 = vst.msk [vmem:[%s5 + $0xa0] sm:$0xff] %vm259, %v810
  %907 = vst.msk [vmem:[%s5 + $0xa8] sm:$0xff] %vm259, %v811
  %908 = vst.msk [vmem:[%s5 + $0xb0] sm:$0xff] %vm259, %v812
  %909 = vst.msk [vmem:[%s5 + $0xb8] sm:$0xff] %vm259, %v813
  %910 = vst.msk [vmem:[%s5 + $0xc0] sm:$0xff] %vm259, %v814
  %911 = vst.msk [vmem:[%s5 + $0xc8] sm:$0xff] %vm259, %v815
  %912 = vst.msk [vmem:[%s5 + $0xd0] sm:$0xff] %vm259, %v816
  %913 = vst.msk [vmem:[%s5 + $0xd8] sm:$0xff] %vm259, %v817
  %914 = vst.msk [vmem:[%s5 + $0xe0] sm:$0xff] %vm259, %v818
  %915 = vst.msk [vmem:[%s5 + $0xe8] sm:$0xff] %vm259, %v819
  %916 = vst.msk [vmem:[%s5 + $0xf0] sm:$0xff] %vm259, %v820
  %917 = vst.msk [vmem:[%s5 + $0xf8] sm:$0xff] %vm259, %v821
  %918 = vst.msk [vmem:[%s5 + $0x100] sm:$0xff] %vm259, %v838
  %919 = vst.msk [vmem:[%s5 + $0x108] sm:$0xff] %vm259, %v839
  %920 = vst.msk [vmem:[%s5 + $0x110] sm:$0xff] %vm259, %v840
  %921 = vst.msk [vmem:[%s5 + $0x118] sm:$0xff] %vm259, %v841
  %922 = vst.msk [vmem:[%s5 + $0x120] sm:$0xff] %vm259, %v842
  %923 = vst.msk [vmem:[%s5 + $0x128] sm:$0xff] %vm259, %v843
  %924 = vst.msk [vmem:[%s5 + $0x130] sm:$0xff] %vm259, %v844
  %925 = vst.msk [vmem:[%s5 + $0x138] sm:$0xff] %vm259, %v845
  %926 = vst.msk [vmem:[%s5 + $0x140] sm:$0xff] %vm259, %v846
  %927 = vst.msk [vmem:[%s5 + $0x148] sm:$0xff] %vm259, %v847
  %928 = vst.msk [vmem:[%s5 + $0x150] sm:$0xff] %vm259, %v848
  %929 = vst.msk [vmem:[%s5 + $0x158] sm:$0xff] %vm259, %v849
  %930 = vst.msk [vmem:[%s5 + $0x160] sm:$0xff] %vm259, %v850
  %931 = vst.msk [vmem:[%s5 + $0x168] sm:$0xff] %vm259, %v851
  %932 = vst.msk [vmem:[%s5 + $0x170] sm:$0xff] %vm259, %v852
  %933 = vst.msk [vmem:[%s5 + $0x178] sm:$0xff] %vm259, %v853
  %934 = vst.msk [vmem:[%s5 + $0x180] sm:$0xff] %vm259, %v870
  %935 = vst.msk [vmem:[%s5 + $0x188] sm:$0xff] %vm259, %v871
  %936 = vst.msk [vmem:[%s5 + $0x190] sm:$0xff] %vm259, %v872
  %937 = vst.msk [vmem:[%s5 + $0x198] sm:$0xff] %vm259, %v873
  %938 = vst.msk [vmem:[%s5 + $0x1a0] sm:$0xff] %vm259, %v874
  %939 = vst.msk [vmem:[%s5 + $0x1a8] sm:$0xff] %vm259, %v875
  %940 = vst.msk [vmem:[%s5 + $0x1b0] sm:$0xff] %vm259, %v876
  %941 = vst.msk [vmem:[%s5 + $0x1b8] sm:$0xff] %vm259, %v877
  %942 = vst.msk [vmem:[%s5 + $0x1c0] sm:$0xff] %vm259, %v878
  %943 = vst.msk [vmem:[%s5 + $0x1c8] sm:$0xff] %vm259, %v879
  %944 = vst.msk [vmem:[%s5 + $0x1d0] sm:$0xff] %vm259, %v880
  %945 = vst.msk [vmem:[%s5 + $0x1d8] sm:$0xff] %vm259, %v881
  %946 = vst.msk [vmem:[%s5 + $0x1e0] sm:$0xff] %vm259, %v882
  %947 = vst.msk [vmem:[%s5 + $0x1e8] sm:$0xff] %vm259, %v883
  %948 = vst.msk [vmem:[%s5 + $0x1f0] sm:$0xff] %vm259, %v884
  %949 = vst.msk [vmem:[%s5 + $0x1f8] sm:$0xff] %vm259, %v885
  // Predicated region
  $region22: #{tpu_custom_call.1} parent=0 // pred_check
    _
  $region23: #{tpu_custom_call.1} parent=0 // pred_check_branch
    %951 = sbr.rel (0) target = $region25
  $region24: #{tpu_custom_call.1} parent=0 // pred_region
    _
  $region25: #{tpu_custom_call.1} parent=0 // pred_fallthru
    _
  // Predicated region
  $region26: #{tpu_custom_call.1} parent=0 // pred_check
    _
  $region27: #{tpu_custom_call.1} parent=0 // pred_check_branch
    %953 = sbr.rel (0) target = $region29
  $region28: #{tpu_custom_call.1} parent=0 // pred_region
    _
  $region29: #{tpu_custom_call.1} parent=0 // pred_fallthru
    _

</llo_original>
